<compile_context>
chip_gen: v7x
topology: tpu7x:2x2x1
jax: 0.10.0
libtpu: 0.0.40
codegen_flags: <defaults>
</compile_context>

<pallas_src>
import functools

import jax
import jax.numpy as jnp
from jax.experimental import pallas as pl
from jax.experimental.pallas import tpu as pltpu

_LANE = 128      # vreg lane width
_SUBLANE = 8     # vreg sublane count (f32)


def _round_up(n, m):
    return ((n + m - 1) // m) * m


def _layout(s_size, h_size, a_size):
    """Row layout of the packed (rows x lane_width) parameter buffer.

    All blocks are lane-replicated (same value in every lane) so the kernel's
    per-iteration weight term is a plain VMEM read:
      rows [b1_row  : b1_row+h_size]            b1[j]            (per row j)
      rows [w1_row0 + s*h_blk : +h_size]        W1[s, j]         (per s, row j)
      rows [b2_row  : b2_row+a_rows]            b2[a] / -1e30 pad (per row a)
      rows [w2_row0 + j*a_rows : +a_rows]       W2[j, a] / 0 pad  (per j, row a)
    """
    h_blk = _round_up(h_size, _SUBLANE)
    a_rows = _round_up(a_size, _SUBLANE)
    b1_row = 0
    w1_row0 = h_blk
    b2_row = w1_row0 + s_size * h_blk
    w2_row0 = b2_row + a_rows
    p_rows = _round_up(w2_row0 + h_size * a_rows, _SUBLANE)
    return dict(h_blk=h_blk, a_rows=a_rows, b1_row=b1_row, w1_row0=w1_row0,
                b2_row=b2_row, w2_row0=w2_row0, p_rows=p_rows)


# ----------------------------------------------------------------------------
# Parameter packing (done ONCE, outside the per-step forward path).
# ----------------------------------------------------------------------------
def pack_params(w1, b1, w2, b2, *, lane_width=512):
    s_size, h_size = w1.shape
    h2, a_size = w2.shape
    assert h2 == h_size
    lane_width = max(_LANE, _round_up(lane_width, _LANE))
    lay = _layout(s_size, h_size, a_size)
    h_blk, a_rows = lay["h_blk"], lay["a_rows"]

    ones = jnp.ones((lane_width,), jnp.float32)
    p = jnp.zeros((lay["p_rows"], lane_width), jnp.float32)

    # b1, replicated across lanes.
    p = p.at[lay["b1_row"]:lay["b1_row"] + h_size, :].set(
        jnp.outer(b1.astype(jnp.float32), ones))
    # W1[s, :], replicated across lanes, one h_blk block per state feature s.
    for s in range(s_size):
        r0 = lay["w1_row0"] + s * h_blk
        p = p.at[r0:r0 + h_size, :].set(jnp.outer(w1[s].astype(jnp.float32), ones))
    # b2, replicated; padded action rows = -1e30 so softmax gives exactly 0.
    b2_pad = jnp.full((a_rows,), -1e30, jnp.float32).at[:a_size].set(
        b2.astype(jnp.float32))
    p = p.at[lay["b2_row"]:lay["b2_row"] + a_rows, :].set(jnp.outer(b2_pad, ones))
    # W2[j, :], replicated; padded action rows = 0.
    for j in range(h_size):
        w2_pad = jnp.zeros((a_rows,), jnp.float32).at[:a_size].set(
            w2[j].astype(jnp.float32))
        r0 = lay["w2_row0"] + j * a_rows
        p = p.at[r0:r0 + a_rows, :].set(jnp.outer(w2_pad, ones))
    return p


# ----------------------------------------------------------------------------
# Kernel: one (s_size, TB) transposed batch tile -> (a_rows, TB) probabilities.
# ----------------------------------------------------------------------------
def _policy_kernel(x_ref, p_ref, out_ref, *, s_size, h_size, tb,
                   h_blk, a_rows, b1_row, w1_row0, b2_row, w2_row0):
    x = x_ref[...]                                            # (S, TB) f32

    # Layer 1 + ReLU: K = s_size unrolled VPU MACs on lane-dense vregs.
    # Weight rows are pre-replicated across lanes -> plain VMEM reads.
    h = p_ref[b1_row:b1_row + h_size, 0:tb]                   # (H, TB) = b1
    for s in range(s_size):
        r0 = w1_row0 + s * h_blk
        h = h + p_ref[r0:r0 + h_size, 0:tb] * x[s:s + 1, :]   # sublane-bcast x row
    h = jnp.maximum(h, 0.0)                                   # (H, TB)

    # Layer 2: K = h_size unrolled VPU MACs into (a_rows, TB) logits.
    # Padded action rows carry b2 = -1e30 and W2 = 0.
    logits = p_ref[b2_row:b2_row + a_rows, 0:tb]              # (A8, TB)
    for j in range(h_size):
        r0 = w2_row0 + j * a_rows
        logits = logits + p_ref[r0:r0 + a_rows, 0:tb] * h[j:j + 1, :]

    # Softmax over the action (sublane) axis: padded rows underflow to exactly
    # 0, real rows normalize correctly.  Exact division (probability outputs).
    m = jnp.max(logits, axis=0, keepdims=True)
    e = jnp.exp(logits - m)
    denom = jnp.sum(e, axis=0, keepdims=True)
    out_ref[...] = e / denom                                  # (A8, TB)


# ----------------------------------------------------------------------------
# Forward wrapper.
#   x: (s_size,)   -> (a_size,)   probabilities (PyTorch single-state call)
#   x: (B, s_size) -> (B, a_size), each row softmaxed over actions
# ----------------------------------------------------------------------------
@functools.partial(jax.jit,
                   static_argnames=("s_size", "h_size", "a_size", "batch_tile"))
def simple_policy_forward(x, packed_params, *, s_size=4, h_size=16, a_size=2,
                          batch_tile=512):
    squeeze = x.ndim == 1
    xb = jnp.atleast_2d(x.astype(jnp.float32))        # module does x.float()
    B = xb.shape[0]
    batch_tile = max(_LANE, _round_up(batch_tile, _LANE))

    lay = _layout(s_size, h_size, a_size)
    pr, pc = packed_params.shape
    # Catch pack/forward layout mismatches at trace time (correctness concern).
    assert pr == lay["p_rows"] and pc % _LANE == 0, \
        "packed_params does not match the (s_size, h_size, a_size) layout"
    a_rows = lay["a_rows"]

    kernel_kw = dict(s_size=s_size, h_size=h_size,
                     h_blk=lay["h_blk"], a_rows=a_rows,
                     b1_row=lay["b1_row"], w1_row0=lay["w1_row0"],
                     b2_row=lay["b2_row"], w2_row0=lay["w2_row0"])

    if B <= _LANE:
        # Single 128-lane tile: no grid at all (no pipeline prologue/epilogue).
        Bp = _LANE
        xt = jnp.pad(xb, ((0, Bp - B), (0, 0))).T     # (S, Bp), batch on lanes
        out = pl.pallas_call(
            functools.partial(_policy_kernel, tb=Bp, **kernel_kw),
            out_shape=jax.ShapeDtypeStruct((a_rows, Bp), jnp.float32),
            in_specs=[pl.BlockSpec(memory_space=pltpu.MemorySpace.VMEM),
                      pl.BlockSpec(memory_space=pltpu.MemorySpace.VMEM)],
            out_specs=pl.BlockSpec(memory_space=pltpu.MemorySpace.VMEM),
        )(xt, packed_params)
    else:
        # Lane-aligned tiles; cap the tile so there are always >= 2 of them
        # (v7x shards the parallel grid axis over its two TensorCores).
        tb = min(batch_tile, _round_up((B + 1) // 2, _LANE), pc)
        Bp = _round_up(B, tb)
        xt = jnp.pad(xb, ((0, Bp - B), (0, 0))).T     # (S, Bp)
        out = pl.pallas_call(
            functools.partial(_policy_kernel, tb=tb, **kernel_kw),
            out_shape=jax.ShapeDtypeStruct((a_rows, Bp), jnp.float32),
            grid=(Bp // tb,),
            in_specs=[
                pl.BlockSpec((s_size, tb), lambda i: (0, i)),
                # Same params block every step -> fetched once, kept resident.
                pl.BlockSpec((pr, pc), lambda i: (0, 0)),
            ],
            out_specs=pl.BlockSpec((a_rows, tb), lambda i: (0, i)),
            compiler_params=pltpu.CompilerParams(
                dimension_semantics=("parallel",)),
        )(xt, packed_params)

    probs = out[:a_size, :B].T                        # (B, a_size), tiny slice
    return probs[0] if squeeze else probs


def init_params(key, s_size=4, h_size=16, a_size=2):
    """Deterministic init mimicking torch.nn.Linear (uniform +/- 1/sqrt(fan_in))."""
    k1, k2, k3, k4 = jax.random.split(key, 4)
    bound1 = 1.0 / (s_size ** 0.5)
    bound2 = 1.0 / (h_size ** 0.5)
    w1 = jax.random.uniform(k1, (s_size, h_size), jnp.float32, -bound1, bound1)
    b1 = jax.random.uniform(k2, (h_size,), jnp.float32, -bound1, bound1)
    w2 = jax.random.uniform(k3, (h_size, a_size), jnp.float32, -bound2, bound2)
    b2 = jax.random.uniform(k4, (a_size,), jnp.float32, -bound2, bound2)
    return w1, b1, w2, b2


if __name__ == "__main__":
    key = jax.random.PRNGKey(0)
    k_param, k_x = jax.random.split(key)

    s_size, h_size, a_size = 4, 16, 2
    w1, b1, w2, b2 = init_params(k_param, s_size, h_size, a_size)
    packed = pack_params(w1, b1, w2, b2)      # hoisted: runs once, not per step

    # Batched forward: 256 states -> two 128-lane tiles on the parallel grid.
    B = 256
    xb = jax.random.normal(k_x, (B, s_size), jnp.float32)
    probs = jax.block_until_ready(simple_policy_forward(xb, packed))

    # Pure-JAX reference (HIGHEST precision so the check is not polluted by
    # XLA's default reduced-precision f32 matmul on TPU; the kernel is exact).
    hp = jax.lax.Precision.HIGHEST
    h_ref = jnp.maximum(jnp.dot(xb, w1, precision=hp) + b1, 0.0)
    ref = jax.nn.softmax(jnp.dot(h_ref, w2, precision=hp) + b2, axis=-1)

    assert probs.shape == (B, a_size)
    assert jnp.allclose(probs, ref, atol=1e-5), float(jnp.max(jnp.abs(probs - ref)))
    assert jnp.allclose(jnp.sum(probs, axis=-1), 1.0, atol=1e-5)

    # Small-batch path (single tile, no grid).
    pb = jax.block_until_ready(simple_policy_forward(xb[:40], packed))
    assert pb.shape == (40, a_size)
    assert jnp.allclose(pb, ref[:40], atol=1e-5)

    # Single-state path, matching the PyTorch call SimplePolicy()(x) with
    # x of shape (4,) and Softmax(dim=0) == softmax over actions.
    p1 = jax.block_until_ready(simple_policy_forward(xb[0], packed))
    assert p1.shape == (a_size,)
    assert jnp.allclose(p1, ref[0], atol=1e-5)

    print("KERNEL_OK")
</pallas_src>

<mosaic_0001>
module attributes {stable_mosaic.version = 11 : i64} {
  func.func @_policy_kernel(%arg0: i32, %arg1: memref<4x128xf32, #tpu.memory_space<vmem>>, %arg2: memref<216x512xf32, #tpu.memory_space<vmem>>, %arg3: memref<8x128xf32, #tpu.memory_space<vmem>>) attributes {dimension_semantics = [#tpu.dimension_semantics<parallel>], iteration_bounds = array<i64: 2>, scalar_prefetch = 0 : i64, scratch_operands = 0 : i64, tpu.core_type = #tpu.core_type<tc>, window_params = [{transform_indices = @transform_0, window_bounds = array<i64: 4, 128>}, {pipeline_mode = #tpu.pipeline_mode<synchronous>, transform_indices = @transform_1, window_bounds = array<i64: 216, 512>}, {transform_indices = @transform_2, window_bounds = array<i64: 8, 128>}]} {
    %c0 = arith.constant 0 : index
    %c0_0 = arith.constant 0 : index
    %0 = vector.load %arg1[%c0, %c0_0] : memref<4x128xf32, #tpu.memory_space<vmem>>, vector<4x128xf32>
    %c0_1 = arith.constant 0 : index
    %c0_2 = arith.constant 0 : index
    %1 = vector.load %arg2[%c0_1, %c0_2] : memref<216x512xf32, #tpu.memory_space<vmem>>, vector<16x128xf32>
    %c16 = arith.constant 16 : index
    %c0_3 = arith.constant 0 : index
    %2 = vector.load %arg2[%c16, %c0_3] : memref<216x512xf32, #tpu.memory_space<vmem>>, vector<16x128xf32>
    %3 = vector.extract_strided_slice %0 {offsets = [0, 0], sizes = [1, 128], strides = [1, 1]} : vector<4x128xf32> to vector<1x128xf32>
    %4 = vector.broadcast %3 : vector<1x128xf32> to vector<16x128xf32>
    %5 = arith.mulf %2, %4 : vector<16x128xf32>
    %6 = arith.addf %1, %5 : vector<16x128xf32>
    %c32 = arith.constant 32 : index
    %c0_4 = arith.constant 0 : index
    %7 = vector.load %arg2[%c32, %c0_4] : memref<216x512xf32, #tpu.memory_space<vmem>>, vector<16x128xf32>
    %8 = vector.extract_strided_slice %0 {offsets = [1, 0], sizes = [1, 128], strides = [1, 1]} : vector<4x128xf32> to vector<1x128xf32>
    %9 = vector.broadcast %8 : vector<1x128xf32> to vector<16x128xf32>
    %10 = arith.mulf %7, %9 : vector<16x128xf32>
    %11 = arith.addf %6, %10 : vector<16x128xf32>
    %c48 = arith.constant 48 : index
    %c0_5 = arith.constant 0 : index
    %12 = vector.load %arg2[%c48, %c0_5] : memref<216x512xf32, #tpu.memory_space<vmem>>, vector<16x128xf32>
    %13 = vector.extract_strided_slice %0 {offsets = [2, 0], sizes = [1, 128], strides = [1, 1]} : vector<4x128xf32> to vector<1x128xf32>
    %14 = vector.broadcast %13 : vector<1x128xf32> to vector<16x128xf32>
    %15 = arith.mulf %12, %14 : vector<16x128xf32>
    %16 = arith.addf %11, %15 : vector<16x128xf32>
    %c64 = arith.constant 64 : index
    %c0_6 = arith.constant 0 : index
    %17 = vector.load %arg2[%c64, %c0_6] : memref<216x512xf32, #tpu.memory_space<vmem>>, vector<16x128xf32>
    %18 = vector.extract_strided_slice %0 {offsets = [3, 0], sizes = [1, 128], strides = [1, 1]} : vector<4x128xf32> to vector<1x128xf32>
    %19 = vector.broadcast %18 : vector<1x128xf32> to vector<16x128xf32>
    %20 = arith.mulf %17, %19 : vector<16x128xf32>
    %21 = arith.addf %16, %20 : vector<16x128xf32>
    %cst = arith.constant 0.000000e+00 : f32
    %22 = vector.broadcast %cst : f32 to vector<16x128xf32>
    %23 = arith.maximumf %21, %22 : vector<16x128xf32>
    %c80 = arith.constant 80 : index
    %c0_7 = arith.constant 0 : index
    %24 = vector.load %arg2[%c80, %c0_7] : memref<216x512xf32, #tpu.memory_space<vmem>>, vector<8x128xf32>
    %c88 = arith.constant 88 : index
    %c0_8 = arith.constant 0 : index
    %25 = vector.load %arg2[%c88, %c0_8] : memref<216x512xf32, #tpu.memory_space<vmem>>, vector<8x128xf32>
    %26 = vector.extract_strided_slice %23 {offsets = [0, 0], sizes = [1, 128], strides = [1, 1]} : vector<16x128xf32> to vector<1x128xf32>
    %27 = vector.broadcast %26 : vector<1x128xf32> to vector<8x128xf32>
    %28 = arith.mulf %25, %27 : vector<8x128xf32>
    %29 = arith.addf %24, %28 : vector<8x128xf32>
    %c96 = arith.constant 96 : index
    %c0_9 = arith.constant 0 : index
    %30 = vector.load %arg2[%c96, %c0_9] : memref<216x512xf32, #tpu.memory_space<vmem>>, vector<8x128xf32>
    %31 = vector.extract_strided_slice %23 {offsets = [1, 0], sizes = [1, 128], strides = [1, 1]} : vector<16x128xf32> to vector<1x128xf32>
    %32 = vector.broadcast %31 : vector<1x128xf32> to vector<8x128xf32>
    %33 = arith.mulf %30, %32 : vector<8x128xf32>
    %34 = arith.addf %29, %33 : vector<8x128xf32>
    %c104 = arith.constant 104 : index
    %c0_10 = arith.constant 0 : index
    %35 = vector.load %arg2[%c104, %c0_10] : memref<216x512xf32, #tpu.memory_space<vmem>>, vector<8x128xf32>
    %36 = vector.extract_strided_slice %23 {offsets = [2, 0], sizes = [1, 128], strides = [1, 1]} : vector<16x128xf32> to vector<1x128xf32>
    %37 = vector.broadcast %36 : vector<1x128xf32> to vector<8x128xf32>
    %38 = arith.mulf %35, %37 : vector<8x128xf32>
    %39 = arith.addf %34, %38 : vector<8x128xf32>
    %c112 = arith.constant 112 : index
    %c0_11 = arith.constant 0 : index
    %40 = vector.load %arg2[%c112, %c0_11] : memref<216x512xf32, #tpu.memory_space<vmem>>, vector<8x128xf32>
    %41 = vector.extract_strided_slice %23 {offsets = [3, 0], sizes = [1, 128], strides = [1, 1]} : vector<16x128xf32> to vector<1x128xf32>
    %42 = vector.broadcast %41 : vector<1x128xf32> to vector<8x128xf32>
    %43 = arith.mulf %40, %42 : vector<8x128xf32>
    %44 = arith.addf %39, %43 : vector<8x128xf32>
    %c120 = arith.constant 120 : index
    %c0_12 = arith.constant 0 : index
    %45 = vector.load %arg2[%c120, %c0_12] : memref<216x512xf32, #tpu.memory_space<vmem>>, vector<8x128xf32>
    %46 = vector.extract_strided_slice %23 {offsets = [4, 0], sizes = [1, 128], strides = [1, 1]} : vector<16x128xf32> to vector<1x128xf32>
    %47 = vector.broadcast %46 : vector<1x128xf32> to vector<8x128xf32>
    %48 = arith.mulf %45, %47 : vector<8x128xf32>
    %49 = arith.addf %44, %48 : vector<8x128xf32>
    %c128 = arith.constant 128 : index
    %c0_13 = arith.constant 0 : index
    %50 = vector.load %arg2[%c128, %c0_13] : memref<216x512xf32, #tpu.memory_space<vmem>>, vector<8x128xf32>
    %51 = vector.extract_strided_slice %23 {offsets = [5, 0], sizes = [1, 128], strides = [1, 1]} : vector<16x128xf32> to vector<1x128xf32>
    %52 = vector.broadcast %51 : vector<1x128xf32> to vector<8x128xf32>
    %53 = arith.mulf %50, %52 : vector<8x128xf32>
    %54 = arith.addf %49, %53 : vector<8x128xf32>
    %c136 = arith.constant 136 : index
    %c0_14 = arith.constant 0 : index
    %55 = vector.load %arg2[%c136, %c0_14] : memref<216x512xf32, #tpu.memory_space<vmem>>, vector<8x128xf32>
    %56 = vector.extract_strided_slice %23 {offsets = [6, 0], sizes = [1, 128], strides = [1, 1]} : vector<16x128xf32> to vector<1x128xf32>
    %57 = vector.broadcast %56 : vector<1x128xf32> to vector<8x128xf32>
    %58 = arith.mulf %55, %57 : vector<8x128xf32>
    %59 = arith.addf %54, %58 : vector<8x128xf32>
    %c144 = arith.constant 144 : index
    %c0_15 = arith.constant 0 : index
    %60 = vector.load %arg2[%c144, %c0_15] : memref<216x512xf32, #tpu.memory_space<vmem>>, vector<8x128xf32>
    %61 = vector.extract_strided_slice %23 {offsets = [7, 0], sizes = [1, 128], strides = [1, 1]} : vector<16x128xf32> to vector<1x128xf32>
    %62 = vector.broadcast %61 : vector<1x128xf32> to vector<8x128xf32>
    %63 = arith.mulf %60, %62 : vector<8x128xf32>
    %64 = arith.addf %59, %63 : vector<8x128xf32>
    %c152 = arith.constant 152 : index
    %c0_16 = arith.constant 0 : index
    %65 = vector.load %arg2[%c152, %c0_16] : memref<216x512xf32, #tpu.memory_space<vmem>>, vector<8x128xf32>
    %66 = vector.extract_strided_slice %23 {offsets = [8, 0], sizes = [1, 128], strides = [1, 1]} : vector<16x128xf32> to vector<1x128xf32>
    %67 = vector.broadcast %66 : vector<1x128xf32> to vector<8x128xf32>
    %68 = arith.mulf %65, %67 : vector<8x128xf32>
    %69 = arith.addf %64, %68 : vector<8x128xf32>
    %c160 = arith.constant 160 : index
    %c0_17 = arith.constant 0 : index
    %70 = vector.load %arg2[%c160, %c0_17] : memref<216x512xf32, #tpu.memory_space<vmem>>, vector<8x128xf32>
    %71 = vector.extract_strided_slice %23 {offsets = [9, 0], sizes = [1, 128], strides = [1, 1]} : vector<16x128xf32> to vector<1x128xf32>
    %72 = vector.broadcast %71 : vector<1x128xf32> to vector<8x128xf32>
    %73 = arith.mulf %70, %72 : vector<8x128xf32>
    %74 = arith.addf %69, %73 : vector<8x128xf32>
    %c168 = arith.constant 168 : index
    %c0_18 = arith.constant 0 : index
    %75 = vector.load %arg2[%c168, %c0_18] : memref<216x512xf32, #tpu.memory_space<vmem>>, vector<8x128xf32>
    %76 = vector.extract_strided_slice %23 {offsets = [10, 0], sizes = [1, 128], strides = [1, 1]} : vector<16x128xf32> to vector<1x128xf32>
    %77 = vector.broadcast %76 : vector<1x128xf32> to vector<8x128xf32>
    %78 = arith.mulf %75, %77 : vector<8x128xf32>
    %79 = arith.addf %74, %78 : vector<8x128xf32>
    %c176 = arith.constant 176 : index
    %c0_19 = arith.constant 0 : index
    %80 = vector.load %arg2[%c176, %c0_19] : memref<216x512xf32, #tpu.memory_space<vmem>>, vector<8x128xf32>
    %81 = vector.extract_strided_slice %23 {offsets = [11, 0], sizes = [1, 128], strides = [1, 1]} : vector<16x128xf32> to vector<1x128xf32>
    %82 = vector.broadcast %81 : vector<1x128xf32> to vector<8x128xf32>
    %83 = arith.mulf %80, %82 : vector<8x128xf32>
    %84 = arith.addf %79, %83 : vector<8x128xf32>
    %c184 = arith.constant 184 : index
    %c0_20 = arith.constant 0 : index
    %85 = vector.load %arg2[%c184, %c0_20] : memref<216x512xf32, #tpu.memory_space<vmem>>, vector<8x128xf32>
    %86 = vector.extract_strided_slice %23 {offsets = [12, 0], sizes = [1, 128], strides = [1, 1]} : vector<16x128xf32> to vector<1x128xf32>
    %87 = vector.broadcast %86 : vector<1x128xf32> to vector<8x128xf32>
    %88 = arith.mulf %85, %87 : vector<8x128xf32>
    %89 = arith.addf %84, %88 : vector<8x128xf32>
    %c192 = arith.constant 192 : index
    %c0_21 = arith.constant 0 : index
    %90 = vector.load %arg2[%c192, %c0_21] : memref<216x512xf32, #tpu.memory_space<vmem>>, vector<8x128xf32>
    %91 = vector.extract_strided_slice %23 {offsets = [13, 0], sizes = [1, 128], strides = [1, 1]} : vector<16x128xf32> to vector<1x128xf32>
    %92 = vector.broadcast %91 : vector<1x128xf32> to vector<8x128xf32>
    %93 = arith.mulf %90, %92 : vector<8x128xf32>
    %94 = arith.addf %89, %93 : vector<8x128xf32>
    %c200 = arith.constant 200 : index
    %c0_22 = arith.constant 0 : index
    %95 = vector.load %arg2[%c200, %c0_22] : memref<216x512xf32, #tpu.memory_space<vmem>>, vector<8x128xf32>
    %96 = vector.extract_strided_slice %23 {offsets = [14, 0], sizes = [1, 128], strides = [1, 1]} : vector<16x128xf32> to vector<1x128xf32>
    %97 = vector.broadcast %96 : vector<1x128xf32> to vector<8x128xf32>
    %98 = arith.mulf %95, %97 : vector<8x128xf32>
    %99 = arith.addf %94, %98 : vector<8x128xf32>
    %c208 = arith.constant 208 : index
    %c0_23 = arith.constant 0 : index
    %100 = vector.load %arg2[%c208, %c0_23] : memref<216x512xf32, #tpu.memory_space<vmem>>, vector<8x128xf32>
    %101 = vector.extract_strided_slice %23 {offsets = [15, 0], sizes = [1, 128], strides = [1, 1]} : vector<16x128xf32> to vector<1x128xf32>
    %102 = vector.broadcast %101 : vector<1x128xf32> to vector<8x128xf32>
    %103 = arith.mulf %100, %102 : vector<8x128xf32>
    %104 = arith.addf %99, %103 : vector<8x128xf32>
    %cst_24 = arith.constant dense<0xFF800000> : vector<128xf32>
    %105 = vector.multi_reduction <maximumf>, %104, %cst_24 [0] : vector<8x128xf32> to vector<128xf32>
    %106 = vector.shape_cast %105 : vector<128xf32> to vector<1x128xf32>
    %107 = vector.broadcast %106 : vector<1x128xf32> to vector<8x128xf32>
    %108 = arith.subf %104, %107 : vector<8x128xf32>
    %109 = math.exp %108 : vector<8x128xf32>
    %cst_25 = arith.constant dense<0.000000e+00> : vector<128xf32>
    %110 = vector.multi_reduction <add>, %109, %cst_25 [0] : vector<8x128xf32> to vector<128xf32>
    %111 = vector.shape_cast %110 : vector<128xf32> to vector<1x128xf32>
    %112 = vector.broadcast %111 : vector<1x128xf32> to vector<8x128xf32>
    %113 = arith.divf %109, %112 : vector<8x128xf32>
    %c0_26 = arith.constant 0 : index
    %c0_27 = arith.constant 0 : index
    %114 = vector.load %arg3[%c0_26, %c0_27] : memref<8x128xf32, #tpu.memory_space<vmem>>, vector<8x128xf32>
    tpu.vector_store %arg3[%c0_26, %c0_27], %113 {strides = array<i32>} : memref<8x128xf32, #tpu.memory_space<vmem>>, vector<8x128xf32>,
    return
  }
  func.func @transform_0(%arg0: i32) -> (i32, i32) {
    %c0_i32 = arith.constant 0 : i32
    %c0_i32_0 = arith.constant 0 : i32
    return %c0_i32, %arg0 : i32, i32
  }
  func.func @transform_1(%arg0: i32) -> (i32, i32) {
    %c0_i32 = arith.constant 0 : i32
    %c0_i32_0 = arith.constant 0 : i32
    %c0_i32_1 = arith.constant 0 : i32
    return %c0_i32, %c0_i32_0 : i32, i32
  }
  func.func @transform_2(%arg0: i32) -> (i32, i32) {
    %c0_i32 = arith.constant 0 : i32
    %c0_i32_0 = arith.constant 0 : i32
    return %c0_i32, %arg0 : i32, i32
  }
}

</mosaic_0001>

<llo_original>
// kernel: simple_policy_forward.1
$region0: #{simple_policy_forward.1}
  #allocation0 [shape = 'u32[]', space=smem, size = 0x4, offset = 0x4, fixed_abs, tag = 'smem constant byte address 0x4 - core index']
  #allocation1 [shape = 'u32[144,128]{1,0:T(1,128)}', space=vmem, size = 0x12000, scoped, tag = 'internal scratch']
  %s0 = inlined_call_operand.hbm [shape: f32[4,256], index: 0, kind: input, shape index: {}]
  %s1 = inlined_call_operand.hbm [shape: f32[216,512], index: 1, kind: input, shape index: {}]
  %s2 = inlined_call_operand.vmem [shape: f32[8,256], index: 2, kind: output, shape index: {}]
  %s3 = sld [smem:[#allocation0]]
  $region49: #{simple_policy_forward.1} parent=0
    _
  %s5 = ssub.s32 1, %s3
  %s6 = scalar_select 0, %s5, %s3
  $region1: #{simple_policy_forward.1} parent=0
    #allocation2 [shape = 'u8[4096]{0}', space=vmem, size = 0x1000, scoped, tag = 'input window, operand 0']
    #allocation3 [shape = 's32[2]{0}', space=sflag, size = 0x8, scoped, tag = 'scoped memory for simple_policy_forward.1']
    #allocation4 [shape = 'u8[442368]{0}', space=vmem, size = 0x6c000, scoped, tag = 'input window, operand 1, single buffered']
    #allocation5 [shape = 's32[1]{0}', space=sflag, size = 0x4, scoped, tag = 'scoped memory for simple_policy_forward.1']
    %7 = vsyncpa [#allocation3], 0
    %s8 = scalar_lea.sflag [#allocation3], 1
    %9 = vsyncpa %s8, 0
    %10 = vsyncpa [#allocation5], 0
    loop: start=0, step=1, limit=4
    $region2: #{simple_policy_forward.1} parent=1 // loop_pre_header
      _
    $region3: #{simple_policy_forward.1} parent=1 // loop_header
      %s12 = sphi 0, %s16
      %p13 = scmp.ge.s32.totalorder %s12, 4
      %s22 = sphi 0, %s24
      %s25 = sphi 0, %s22
      %s26 = sphi 0, %s25
      %s42 = sphi 0, %s26
      %s46 = sphi 0, %s46
      %s48 = sphi 0, %s46
      %s49 = sphi 0, %s48
      %s63 = sphi 0, %s49
      %s69 = sphi 0, %s71
      %s72 = sphi 0, %s69
      %s73 = sphi 0, %s72
      %s89 = sphi 0, %s73
    $region4: #{simple_policy_forward.1} parent=1 // loop_header_branch
      %15 = sbr.rel (%p13) target = $region8
    $region5: #{simple_policy_forward.1} parent=1 // loop_body
      %s17 = ssub.s32 %s12, 1
      %s18 = ssub.s32 %s12, 2
      %s19 = sadd.s32 %s12, 1
      %s20 = ssub.s32 %s12, %s19
      %p21 = scmp.eq.s32.totalorder %s20, 0
      %s23 = sadd.s32 %s22, 1
      %s24 = scalar_select %p21, %s22, %s23
      %p27 = pneg %p21
      %p28 = scmp.eq.s32.totalorder %s12, 1
      %p29 = por %p27, %p28
      %p30 = scmp.ne.s32.totalorder %s22, %s25
      %p31 = scmp.eq.s32.totalorder %s12, 0
      %p32 = por %p30, %p31
      %p33 = scmp.ne.s32.totalorder %s22, %s25
      %p34 = scmp.eq.s32.totalorder %s17, 1
      %p35 = por %p33, %p34
      %p36 = scmp.ne.s32.totalorder %s25, %s26
      %p37 = scmp.eq.s32.totalorder %s17, 0
      %p38 = por %p36, %p37
      %p39 = scmp.ne.s32.totalorder %s25, %s26
      %p40 = scmp.eq.s32.totalorder %s18, 1
      %p41 = por %p39, %p40
      %p43 = scmp.ne.s32.totalorder %s26, %s42
      %p44 = scmp.eq.s32.totalorder %s18, 0
      %p45 = por %p43, %p44
      %s47 = sadd.s32 %s46, 1
      %p50 = scmp.eq.s32.totalorder %s12, 1
      %p51 = scmp.ne.s32.totalorder %s46, %s48
      %p52 = scmp.eq.s32.totalorder %s12, 0
      %p53 = por %p51, %p52
      %p54 = scmp.ne.s32.totalorder %s46, %s48
      %p55 = scmp.eq.s32.totalorder %s17, 1
      %p56 = por %p54, %p55
      %p57 = scmp.ne.s32.totalorder %s48, %s49
      %p58 = scmp.eq.s32.totalorder %s17, 0
      %p59 = por %p57, %p58
      %p60 = scmp.ne.s32.totalorder %s48, %s49
      %p61 = scmp.eq.s32.totalorder %s18, 1
      %p62 = por %p60, %p61
      %p64 = scmp.ne.s32.totalorder %s49, %s63
      %p65 = scmp.eq.s32.totalorder %s18, 0
      %p66 = por %p64, %p65
      %s67 = ssub.s32 %s12, %s19
      %p68 = scmp.eq.s32.totalorder %s67, 0
      %s70 = sadd.s32 %s69, 1
      %s71 = scalar_select %p68, %s69, %s70
      %p74 = pneg %p68
      %p75 = scmp.eq.s32.totalorder %s12, 1
      %p76 = por %p74, %p75
      %p77 = scmp.ne.s32.totalorder %s69, %s72
      %p78 = scmp.eq.s32.totalorder %s12, 0
      %p79 = por %p77, %p78
      %p80 = scmp.ne.s32.totalorder %s69, %s72
      %p81 = scmp.eq.s32.totalorder %s17, 1
      %p82 = por %p80, %p81
      %p83 = scmp.ne.s32.totalorder %s72, %s73
      %p84 = scmp.eq.s32.totalorder %s17, 0
      %p85 = por %p83, %p84
      %p86 = scmp.ne.s32.totalorder %s72, %s73
      %p87 = scmp.eq.s32.totalorder %s18, 1
      %p88 = por %p86, %p87
      %p90 = scmp.ne.s32.totalorder %s73, %s89
      %p91 = scmp.eq.s32.totalorder %s18, 0
      %p92 = por %p90, %p91
      %p93 = scmp.le.s32.totalorder 1, %s12
      %p94 = scmp.lt.s32.totalorder %s12, 3
      %p95 = pnand %p93, %p94
      %p96 = pneg %p95
      // Predicated region
      $region9: #{simple_policy_forward.1} parent=5 // pred_check
        _
      $region10: #{simple_policy_forward.1} parent=5 // pred_check_branch
        %98 = sbr.rel (%p95) target = $region12
      $region11: #{simple_policy_forward.1} parent=5 // pred_region
        %s99 = ssub.s32 %s12, 1
        // Predicated region
        $region13: #{simple_policy_forward.1} parent=11 // pred_check
          %p100 = pneg %p59
        $region14: #{simple_policy_forward.1} parent=11 // pred_check_branch
          %102 = sbr.rel (%p100) target = $region16
        $region15: #{simple_policy_forward.1} parent=11 // pred_region
          %s104 = ssub.s32 13824, 13824
          %105 = vsyncadd [#allocation5], %s104
          %s106 = sshll.u32 [#allocation4], 4
          %s107 = int_to_ptr.vmem [resolvable:$true] %s106
          %112 = dma.hbm_to_vmem [thread:$0]  %s1, 13824, %s107, [#allocation5], 512, 512, 32
        $region16: #{simple_policy_forward.1} parent=11 // pred_fallthru
          _
      $region12: #{simple_policy_forward.1} parent=5 // pred_fallthru
        _
      %p113 = scmp.lt.s32.totalorder %s12, 2
      // Predicated region
      $region17: #{simple_policy_forward.1} parent=5 // pred_check
        %p114 = pneg %p113
      $region18: #{simple_policy_forward.1} parent=5 // pred_check_branch
        %116 = sbr.rel (%p114) target = $region20
      $region19: #{simple_policy_forward.1} parent=5 // pred_region
        // Predicated region
        $region21: #{simple_policy_forward.1} parent=19 // pred_check
          %p117 = pneg %p32
        $region22: #{simple_policy_forward.1} parent=19 // pred_check_branch
          %119 = sbr.rel (%p117) target = $region24
        $region23: #{simple_policy_forward.1} parent=19 // pred_region
          %s120 = sand.u32 %s22, 1
          %s121 = scalar_lea.sflag [#allocation3], %s120
          %s122 = sand.u32 %s22, 1
          %s123 = smul.addr %s122, 4
          %s124 = scalar_lea.vmem [#allocation2], %s123
          %s126 = ssub.s32 64, 64
          %127 = vsyncadd %s121, %s126
          %s128 = smul.addr %s12, 64
          %s129 = scalar_lea.hbm %s0, %s128
          %s131 = sshll.u32 %s124, 4
          %s132 = int_to_ptr.vmem [resolvable:$true] %s131
          %134 = dma.hbm_to_vmem [thread:$0]  %s129, 64, %s132, %s121
        $region24: #{simple_policy_forward.1} parent=19 // pred_fallthru
          _
      $region20: #{simple_policy_forward.1} parent=5 // pred_fallthru
        _
      %p135 = scmp.le.s32.totalorder 1, %s12
      %p136 = scmp.lt.s32.totalorder %s12, 3
      %p137 = pnand %p135, %p136
      %p138 = pneg %p137
      // Predicated region
      $region25: #{simple_policy_forward.1} parent=5 // pred_check
        _
      $region26: #{simple_policy_forward.1} parent=5 // pred_check_branch
        %140 = sbr.rel (%p137) target = $region28
      $region27: #{simple_policy_forward.1} parent=5 // pred_region
        %s141 = ssub.s32 %s12, 1
        %s142 = sand.u32 %s25, 1
        %s143 = scalar_lea.sflag [#allocation3], %s142
        %s144 = sand.u32 %s25, 1
        %s145 = smul.addr %s144, 4
        %s146 = scalar_lea.vmem [#allocation2], %s145
        // Predicated region
        $region29: #{simple_policy_forward.1} parent=27 // pred_check
          %p147 = pneg %p38
        $region30: #{simple_policy_forward.1} parent=27 // pred_check_branch
          %149 = sbr.rel (%p147) target = $region32
        $region31: #{simple_policy_forward.1} parent=27 // pred_region
          %150 = dma.done %s143, 64
        $region32: #{simple_policy_forward.1} parent=27 // pred_fallthru
          _
        // Predicated region
        $region33: #{simple_policy_forward.1} parent=27 // pred_check
          %p151 = pneg %p59
        $region34: #{simple_policy_forward.1} parent=27 // pred_check_branch
          %153 = sbr.rel (%p151) target = $region36
        $region35: #{simple_policy_forward.1} parent=27 // pred_region
          %154 = dma.done [#allocation5], 13824
        $region36: #{simple_policy_forward.1} parent=27 // pred_fallthru
          _
        %s155 = sand.u32 %s25, 1
        %s156 = scalar_lea.sflag [#allocation3], %s155
        %s157 = sand.u32 %s25, 1
        %s158 = smul.addr %s157, 4
        %s159 = scalar_lea.vmem [#allocation2], %s158
        %p160 = pneg %p38
        %p161 = pneg %p35
        %p162 = pneg %p59
        %p163 = pneg %p56
        %p164 = pneg %p85
        %p165 = pneg %p82
        %p166 = scmp.lt.s32.totalorder %s17, 1
        %s167 = scalar_select %p166, %s17, 1
        %s168 = smul.addr %s167, 8
        %s169 = scalar_lea.vmem %s2, %s168
        %p170 = scmp.lt.s32.totalorder %s17, 1
        %s171 = scalar_select %p170, %s17, 1
        %s172 = smul.addr %s171, 8
        %s173 = scalar_lea.vmem %s2, %s172
        %v174 = vld [vmem:[%s146] sm:$0xf]
        %v175 = vld [vmem:[#allocation4] sm:$0xff]
        %v176 = vld [vmem:[#allocation4 + $0x20] sm:$0xff]
        %v177 = vld [vmem:[#allocation4 + $0x40] sm:$0xff]
        %v178 = vld [vmem:[#allocation4 + $0x60] sm:$0xff]
        %v179 = vlaneseq
        %v180 = vshrl.u32 %v179, 7
        %v181 = vsub.s32 0, %v180
        %v182 = vrot.slane %v174, %v181
        %v183 = vmul.f32 %v177, %v182
        %v184 = vmul.f32 %v178, %v182
        %v185 = vadd.f32 %v175, %v183
        %v186 = vadd.f32 %v176, %v184
        %v187 = vld [vmem:[#allocation4 + $0x80] sm:$0xff]
        %v188 = vld [vmem:[#allocation4 + $0xa0] sm:$0xff]
        %v189 = vlaneseq
        %v190 = vshrl.u32 %v189, 7
        %v191 = vsub.s32 1, %v190
        %v192 = vrot.slane %v174, %v191
        %v193 = vmul.f32 %v187, %v192
        %v194 = vmul.f32 %v188, %v192
        %v195 = vadd.f32 %v185, %v193
        %v196 = vadd.f32 %v186, %v194
        %v197 = vld [vmem:[#allocation4 + $0xc0] sm:$0xff]
        %v198 = vld [vmem:[#allocation4 + $0xe0] sm:$0xff]
        %v199 = vlaneseq
        %v200 = vshrl.u32 %v199, 7
        %v201 = vsub.s32 2, %v200
        %v202 = vrot.slane %v174, %v201
        %v203 = vmul.f32 %v197, %v202
        %v204 = vmul.f32 %v198, %v202
        %v205 = vadd.f32 %v195, %v203
        %v206 = vadd.f32 %v196, %v204
        %v207 = vld [vmem:[#allocation4 + $0x100] sm:$0xff]
        %v208 = vld [vmem:[#allocation4 + $0x120] sm:$0xff]
        %v209 = vlaneseq
        %v210 = vshrl.u32 %v209, 7
        %v211 = vsub.s32 3, %v210
        %v212 = vrot.slane %v174, %v211
        %v213 = vmul.f32 %v207, %v212
        %v214 = vmul.f32 %v208, %v212
        %v215 = vadd.f32 %v205, %v213
        %v216 = vadd.f32 %v206, %v214
        %v217 = vmax.f32 %v215, 0.0
        %v218 = vmax.f32 %v216, 0.0
        %v219 = vld [vmem:[#allocation4 + $0x140] sm:$0xff]
        %v220 = vld [vmem:[#allocation4 + $0x160] sm:$0xff]
        %v221 = vlaneseq
        %v222 = vshrl.u32 %v221, 7
        %v223 = vsub.s32 0, %v222
        %v224 = vrot.slane %v217, %v223
        %v225 = vmul.f32 %v220, %v224
        %v226 = vadd.f32 %v219, %v225
        %v227 = vld [vmem:[#allocation4 + $0x180] sm:$0xff]
        %v228 = vlaneseq
        %v229 = vshrl.u32 %v228, 7
        %v230 = vsub.s32 1, %v229
        %v231 = vrot.slane %v217, %v230
        %v232 = vmul.f32 %v227, %v231
        %v233 = vadd.f32 %v226, %v232
        %v234 = vld [vmem:[#allocation4 + $0x1a0] sm:$0xff]
        %v235 = vlaneseq
        %v236 = vshrl.u32 %v235, 7
        %v237 = vsub.s32 2, %v236
        %v238 = vrot.slane %v217, %v237
        %v239 = vmul.f32 %v234, %v238
        %v240 = vadd.f32 %v233, %v239
        %v241 = vld [vmem:[#allocation4 + $0x1c0] sm:$0xff]
        %v242 = vlaneseq
        %v243 = vshrl.u32 %v242, 7
        %v244 = vsub.s32 3, %v243
        %v245 = vrot.slane %v217, %v244
        %v246 = vmul.f32 %v241, %v245
        %v247 = vadd.f32 %v240, %v246
        %v248 = vld [vmem:[#allocation4 + $0x1e0] sm:$0xff]
        %v249 = vlaneseq
        %v250 = vshrl.u32 %v249, 7
        %v251 = vsub.s32 4, %v250
        %v252 = vrot.slane %v217, %v251
        %v253 = vmul.f32 %v248, %v252
        %v254 = vadd.f32 %v247, %v253
        %v255 = vld [vmem:[#allocation4 + $0x200] sm:$0xff]
        %v256 = vlaneseq
        %v257 = vshrl.u32 %v256, 7
        %v258 = vsub.s32 5, %v257
        %v259 = vrot.slane %v217, %v258
        %v260 = vmul.f32 %v255, %v259
        %v261 = vadd.f32 %v254, %v260
        %v262 = vld [vmem:[#allocation4 + $0x220] sm:$0xff]
        %v263 = vlaneseq
        %v264 = vshrl.u32 %v263, 7
        %v265 = vsub.s32 6, %v264
        %v266 = vrot.slane %v217, %v265
        %v267 = vmul.f32 %v262, %v266
        %v268 = vadd.f32 %v261, %v267
        %v269 = vld [vmem:[#allocation4 + $0x240] sm:$0xff]
        %v270 = vlaneseq
        %v271 = vshrl.u32 %v270, 7
        %v272 = vsub.s32 7, %v271
        %v273 = vrot.slane %v217, %v272
        %v274 = vmul.f32 %v269, %v273
        %v275 = vadd.f32 %v268, %v274
        %v276 = vld [vmem:[#allocation4 + $0x260] sm:$0xff]
        %v277 = vlaneseq
        %v278 = vshrl.u32 %v277, 7
        %v279 = vsub.s32 0, %v278
        %v280 = vrot.slane %v218, %v279
        %v281 = vmul.f32 %v276, %v280
        %v282 = vadd.f32 %v275, %v281
        %v283 = vld [vmem:[#allocation4 + $0x280] sm:$0xff]
        %v284 = vlaneseq
        %v285 = vshrl.u32 %v284, 7
        %v286 = vsub.s32 1, %v285
        %v287 = vrot.slane %v218, %v286
        %v288 = vmul.f32 %v283, %v287
        %v289 = vadd.f32 %v282, %v288
        %v290 = vld [vmem:[#allocation4 + $0x2a0] sm:$0xff]
        %v291 = vlaneseq
        %v292 = vshrl.u32 %v291, 7
        %v293 = vsub.s32 2, %v292
        %v294 = vrot.slane %v218, %v293
        %v295 = vmul.f32 %v290, %v294
        %v296 = vadd.f32 %v289, %v295
        %v297 = vld [vmem:[#allocation4 + $0x2c0] sm:$0xff]
        %v298 = vlaneseq
        %v299 = vshrl.u32 %v298, 7
        %v300 = vsub.s32 3, %v299
        %v301 = vrot.slane %v218, %v300
        %v302 = vmul.f32 %v297, %v301
        %v303 = vadd.f32 %v296, %v302
        %v304 = vld [vmem:[#allocation4 + $0x2e0] sm:$0xff]
        %v305 = vlaneseq
        %v306 = vshrl.u32 %v305, 7
        %v307 = vsub.s32 4, %v306
        %v308 = vrot.slane %v218, %v307
        %v309 = vmul.f32 %v304, %v308
        %v310 = vadd.f32 %v303, %v309
        %v311 = vld [vmem:[#allocation4 + $0x300] sm:$0xff]
        %v312 = vlaneseq
        %v313 = vshrl.u32 %v312, 7
        %v314 = vsub.s32 5, %v313
        %v315 = vrot.slane %v218, %v314
        %v316 = vmul.f32 %v311, %v315
        %v317 = vadd.f32 %v310, %v316
        %v318 = vld [vmem:[#allocation4 + $0x320] sm:$0xff]
        %v319 = vlaneseq
        %v320 = vshrl.u32 %v319, 7
        %v321 = vsub.s32 6, %v320
        %v322 = vrot.slane %v218, %v321
        %v323 = vmul.f32 %v318, %v322
        %v324 = vadd.f32 %v317, %v323
        %v325 = vld [vmem:[#allocation4 + $0x340] sm:$0xff]
        %v326 = vlaneseq
        %v327 = vshrl.u32 %v326, 7
        %v328 = vsub.s32 7, %v327
        %v329 = vrot.slane %v218, %v328
        %v330 = vmul.f32 %v325, %v329
        %v331 = vadd.f32 %v324, %v330
        %v332 = vrot.slane %v331, 4
        %v333 = vmax.f32 %v331, %v332
        %v334 = vrot.slane %v333, 2
        %v335 = vmax.f32 %v333, %v334
        %v336 = vrot.slane %v335, 1
        %v337 = vmax.f32 %v335, %v336
        %v338 = vsub.f32 %v331, %v337
        %v339 = vmul.f32 %v338, 1.442695
        %v340 = vpow.pop %v339
        %v341 = vrot.slane %v340, 4
        %v342 = vadd.f32 %v340, %v341
        %v343 = vrot.slane %v342, 2
        %v344 = vadd.f32 %v342, %v343
        %v345 = vrot.slane %v344, 1
        %v346 = vadd.f32 %v344, %v345
        %v347 = vrcp.pop %v346
        %v348 = vmul.f32 %v340, %v347
        %349 = vst [vmem:[%s173] sm:$0xff] %v348
        %p350 = scmp.lt.s32.totalorder %s17, 1
        %s351 = scalar_select %p350, %s17, 1
        %s352 = smul.addr %s351, 8
        %s353 = scalar_lea.vmem %s2, %s352
        // Predicated region
        $region37: #{simple_policy_forward.1} parent=27 // pred_check
          %p354 = pneg %p82
        $region38: #{simple_policy_forward.1} parent=27 // pred_check_branch
          %356 = sbr.rel (%p354) target = $region40
        $region39: #{simple_policy_forward.1} parent=27 // pred_region
          _
        $region40: #{simple_policy_forward.1} parent=27 // pred_fallthru
          _
      $region28: #{simple_policy_forward.1} parent=5 // pred_fallthru
        _
      %p357 = scmp.le.s32.totalorder 2, %s12
      // Predicated region
      $region41: #{simple_policy_forward.1} parent=5 // pred_check
        %p358 = pneg %p357
      $region42: #{simple_policy_forward.1} parent=5 // pred_check_branch
        %360 = sbr.rel (%p358) target = $region44
      $region43: #{simple_policy_forward.1} parent=5 // pred_region
        %s361 = ssub.s32 %s12, 2
        // Predicated region
        $region45: #{simple_policy_forward.1} parent=43 // pred_check
          %p362 = pneg %p88
        $region46: #{simple_policy_forward.1} parent=43 // pred_check_branch
          %364 = sbr.rel (%p362) target = $region48
        $region47: #{simple_policy_forward.1} parent=43 // pred_region
          %p365 = scmp.lt.s32.totalorder %s18, 1
          %s366 = scalar_select %p365, %s18, 1
          %s367 = smul.addr %s366, 8
          %s368 = scalar_lea.vmem %s2, %s367
        $region48: #{simple_policy_forward.1} parent=43 // pred_fallthru
          _
      $region44: #{simple_policy_forward.1} parent=5 // pred_fallthru
        _
    $region6: #{simple_policy_forward.1} parent=1 // loop_footer
      %s16 = sadd.s32 1, %s12
    $region7: #{simple_policy_forward.1} parent=1 // loop_footer_branch
      %11 = sbr.rel target = $region3
    $region8: #{simple_policy_forward.1} parent=1 // loop_exit
      _
    %369 = vsyncpa [#allocation3], 1
    %s370 = scalar_lea.sflag [#allocation3], 1
    %371 = vsyncpa %s370, 1
    %372 = vsyncpa [#allocation5], 1

</llo_original>
